<compile_context>
chip_gen: v7x
topology: tpu7x:2x2x1
jax: 0.10.0
libtpu: 0.0.40
codegen_flags: <defaults>
</compile_context>

<pallas_src>
import functools

import jax
import jax.numpy as jnp
from jax.experimental import pallas as pl
from jax.experimental.pallas import tpu as pltpu


def _round_up(x, m):
    return (x + m - 1) // m * m


# ---------------------------------------------------------------------------
# Kernel
# ---------------------------------------------------------------------------
def _policy_kernel(
    obs_ref,                       # (TB, OBS)        f32
    mask_ref,                      # (1, HEAD_P)      f32  (0 on logit cols, -1e30 elsewhere)
    w_repr_ref, b_repr_ref,        # (OBS, REPR_P) bf16 / (1, REPR_P) f32
    w_h_ref, b_h_ref,              # (REPR_P, H2_P) bf16 / (1, H2_P) f32
    w_o_ref, b_o_ref,              # (H2_P, HEAD_P) f32 / (1, HEAD_P) f32
    out_ref,                       # (TB, OUT_P) f32 packed: [0:A)=logits, [A:2A)=logp,
                                   #                         [2A]=value, [2A+1:+repr)=state
    *, n_actions, repr_dim, include_state,
):
    obs = obs_ref[...]

    # --- representation: Linear + ReLU (bf16 matmul operands, f32 accumulate) ---
    state = jnp.maximum(
        jnp.dot(obs.astype(jnp.bfloat16), w_repr_ref[...],
                preferred_element_type=jnp.float32) + b_repr_ref[...],
        0.0,
    )

    # --- fused actor|critic hidden layer: one matmul for both heads ---
    h = jnp.maximum(
        jnp.dot(state.astype(jnp.bfloat16), w_h_ref[...],
                preferred_element_type=jnp.float32) + b_h_ref[...],
        0.0,
    )

    # --- fused block-diagonal output layer (f32 operands: tiny, keeps value fidelity) ---
    # cols [0:A)=actor logits, [A]=critic value
    head = jnp.dot(h, w_o_ref[...], preferred_element_type=jnp.float32) + b_o_ref[...]

    # --- fused Categorical log-softmax over the A logit columns (EUP/XLU slots idle) ---
    masked = head + mask_ref[...]
    m = jnp.max(masked, axis=-1, keepdims=True)
    lse = m + jnp.log(jnp.sum(jnp.exp(masked - m), axis=-1, keepdims=True))
    logp = head - lse                        # valid only in columns [0:A)

    # --- pack everything into one lane-dense output slab ---
    A = n_actions
    out_ref[...] = jnp.zeros_like(out_ref)                    # deterministic pad columns
    out_ref[:, 0:A] = head[:, 0:A]                            # logits
    out_ref[:, A:2 * A] = logp[:, 0:A]                        # log-probs
    out_ref[:, 2 * A:2 * A + 1] = head[:, A:A + 1]            # value
    if include_state:
        out_ref[:, 2 * A + 1:2 * A + 1 + repr_dim] = state[:, 0:repr_dim]


# ---------------------------------------------------------------------------
# Parameter construction (mirrors nn.Linear) and fusion/padding
# ---------------------------------------------------------------------------
def _init_linear(key, fan_in, fan_out):
    """nn.Linear-style uniform(-1/sqrt(fan_in), 1/sqrt(fan_in)); weight kept (in, out)."""
    kw, kb = jax.random.split(key)
    bound = 1.0 / jnp.sqrt(jnp.float32(fan_in))
    w = jax.random.uniform(kw, (fan_in, fan_out), jnp.float32, -bound, bound)
    b = jax.random.uniform(kb, (1, fan_out), jnp.float32, -bound, bound)
    return w, b


def make_params(obs_dim, repr_dim, actor_hidden, critic_hidden, action_dim, seed=1):
    keys = jax.random.split(jax.random.PRNGKey(seed), 5)
    w_repr, b_repr = _init_linear(keys[0], obs_dim, repr_dim)
    wa1, ba1 = _init_linear(keys[1], repr_dim, actor_hidden)
    wa2, ba2 = _init_linear(keys[2], actor_hidden, action_dim)
    wc1, bc1 = _init_linear(keys[3], repr_dim, critic_hidden)
    wc2, bc2 = _init_linear(keys[4], critic_hidden, 1)
    return dict(w_repr=w_repr, b_repr=b_repr,
                wa1=wa1, ba1=ba1, wa2=wa2, ba2=ba2,
                wc1=wc1, bc1=bc1, wc2=wc2, bc2=bc2)


def fuse_and_pad_params(p, action_dim):
    """Build the fused, lane-padded (128-multiple) weights the kernel consumes."""
    obs_dim, repr_dim = p["w_repr"].shape
    hid_a = p["wa1"].shape[1]
    hid_c = p["wc1"].shape[1]
    h2 = hid_a + hid_c

    repr_p = _round_up(repr_dim, 128)
    h2_p = _round_up(h2, 128)
    head_p = _round_up(action_dim + 1, 128)

    w_repr = jnp.zeros((obs_dim, repr_p), jnp.float32).at[:, :repr_dim].set(p["w_repr"])
    b_repr = jnp.zeros((1, repr_p), jnp.float32).at[:, :repr_dim].set(p["b_repr"])

    w_h = jnp.zeros((repr_p, h2_p), jnp.float32)
    w_h = w_h.at[:repr_dim, :hid_a].set(p["wa1"]).at[:repr_dim, hid_a:h2].set(p["wc1"])
    b_h = jnp.zeros((1, h2_p), jnp.float32)
    b_h = b_h.at[:, :hid_a].set(p["ba1"]).at[:, hid_a:h2].set(p["bc1"])

    # Block-diagonal output weight: actor rows -> logit columns, critic rows -> value column.
    w_o = jnp.zeros((h2_p, head_p), jnp.float32)
    w_o = w_o.at[:hid_a, :action_dim].set(p["wa2"])
    w_o = w_o.at[hid_a:h2, action_dim:action_dim + 1].set(p["wc2"])
    b_o = jnp.zeros((1, head_p), jnp.float32)
    b_o = b_o.at[:, :action_dim].set(p["ba2"]).at[:, action_dim:action_dim + 1].set(p["bc2"])

    # Additive log-softmax mask row: 0 on logit columns, -1e30 on value/pad columns.
    mask = jnp.where(jnp.arange(head_p)[None, :] < action_dim,
                     jnp.float32(0.0), jnp.float32(-1e30))

    return dict(
        w_repr=w_repr.astype(jnp.bfloat16), b_repr=b_repr,
        w_h=w_h.astype(jnp.bfloat16), b_h=b_h,
        w_o=w_o, b_o=b_o,                      # final layer kept f32 (value fidelity)
        mask=mask,
        repr_dim=repr_dim, action_dim=action_dim,
    )


# ---------------------------------------------------------------------------
# Wrapper
# ---------------------------------------------------------------------------
def actor_critic_forward(obs, fused, *, include_state=True, tb_max=1024, min_split_batch=512):
    """Returns (outputs, dist, value) mirroring the torch module:
       outputs = {'state': (B, REPR)} (empty dict if include_state=False),
       dist = {'logits': (B, A), 'log_probs': (B, A)}, value = (B,)."""
    repr_dim = fused["repr_dim"]
    A = fused["action_dim"]

    B, obs_dim = obs.shape
    repr_p = fused["w_repr"].shape[1]
    h2_p = fused["w_h"].shape[1]
    head_p = fused["w_o"].shape[1]

    packed_cols = 2 * A + 1 + (repr_dim if include_state else 0)
    out_p = _round_up(packed_cols, 128)

    # Padding-aware batch tiling: minimal padding, >=2 grid steps for big batches (v7x megacore).
    n_steps = max(1, pl.cdiv(B, tb_max))
    if B >= min_split_batch:
        n_steps = max(n_steps, 2)
    TB = _round_up(pl.cdiv(B, n_steps), 8)
    B_pad = TB * n_steps
    if B_pad != B:
        obs = jnp.pad(obs, ((0, B_pad - B), (0, 0)))
    grid = (n_steps,)

    kernel = functools.partial(_policy_kernel, n_actions=A, repr_dim=repr_dim,
                               include_state=include_state)

    flops = 2 * B_pad * (obs_dim * repr_p + repr_p * h2_p + h2_p * head_p)
    param_bytes = sum(int(fused[k].size) * fused[k].dtype.itemsize
                      for k in ("w_repr", "b_repr", "w_h", "b_h", "w_o", "b_o", "mask"))
    bytes_accessed = obs.size * 4 + param_bytes + B_pad * out_p * 4
    cost = pl.CostEstimate(flops=flops, transcendentals=B_pad * head_p,
                           bytes_accessed=bytes_accessed)

    def row_spec(n):
        return pl.BlockSpec((TB, n), lambda i: (i, 0))

    def const_spec(a):
        # Full-array block, constant index across the grid.
        return pl.BlockSpec(a.shape, lambda i: (0, 0))

    out = pl.pallas_call(
        kernel,
        out_shape=jax.ShapeDtypeStruct((B_pad, out_p), jnp.float32),
        grid_spec=pltpu.PrefetchScalarGridSpec(
            num_scalar_prefetch=0,
            grid=grid,
            in_specs=[
                row_spec(obs_dim),
                const_spec(fused["mask"]),
                const_spec(fused["w_repr"]), const_spec(fused["b_repr"]),
                const_spec(fused["w_h"]), const_spec(fused["b_h"]),
                const_spec(fused["w_o"]), const_spec(fused["b_o"]),
            ],
            out_specs=row_spec(out_p),
        ),
        compiler_params=pltpu.CompilerParams(
            dimension_semantics=("parallel",),
            vmem_limit_bytes=32 * 1024 * 1024,
        ),
        cost_estimate=cost,
    )(obs, fused["mask"], fused["w_repr"], fused["b_repr"],
      fused["w_h"], fused["b_h"], fused["w_o"], fused["b_o"])

    dist = {"logits": out[:B, 0:A], "log_probs": out[:B, A:2 * A]}
    value = out[:B, 2 * A]                                  # CriticNet.forward: model(x)[:, 0]
    outputs = {"state": out[:B, 2 * A + 1:2 * A + 1 + repr_dim]} if include_state else {}
    return outputs, dist, value


# ---------------------------------------------------------------------------
# Pure-JAX f32 reference of the same module math
# ---------------------------------------------------------------------------
def _reference_forward(obs, p):
    relu = lambda x: jnp.maximum(x, 0.0)
    state = relu(obs @ p["w_repr"] + p["b_repr"])
    logits = relu(state @ p["wa1"] + p["ba1"]) @ p["wa2"] + p["ba2"]
    value = (relu(state @ p["wc1"] + p["bc1"]) @ p["wc2"] + p["bc2"])[:, 0]
    return {"state": state}, logits, value


if __name__ == "__main__":
    # Discrete(4) action space, obs dim 16, Basic_MLP representation with 32 units,
    # actor_hidden_size=[32], critic_hidden_size=[32], batch=8.
    B, OBS, REPR, HID, ACT = 8, 16, 32, 32, 4

    obs = jax.random.normal(jax.random.PRNGKey(0), (B, OBS), jnp.float32)
    params = make_params(OBS, REPR, HID, HID, ACT, seed=1)
    fused = fuse_and_pad_params(params, ACT)

    outputs, dist, value = actor_critic_forward(obs, fused, include_state=True)
    jax.block_until_ready((outputs["state"], dist["logits"], dist["log_probs"], value))

    # sanity check against the plain-JAX f32 reference (bf16 matmul operands -> loose tol)
    ref_out, ref_logits, ref_value = _reference_forward(obs, params)
    assert outputs["state"].shape == (B, REPR)
    assert dist["logits"].shape == (B, ACT)
    assert dist["log_probs"].shape == (B, ACT)
    assert value.shape == (B,)
    assert jnp.allclose(outputs["state"], ref_out["state"], atol=5e-2)
    assert jnp.allclose(dist["logits"], ref_logits, atol=5e-2)
    assert jnp.allclose(value, ref_value, atol=5e-2)
    assert jnp.allclose(dist["log_probs"], jax.nn.log_softmax(ref_logits, axis=-1), atol=5e-2)

    # Inference/rollout variant that skips the state writeback entirely.
    outputs2, dist2, value2 = actor_critic_forward(obs, fused, include_state=False)
    jax.block_until_ready((dist2["logits"], value2))
    assert outputs2 == {}
    assert jnp.allclose(dist2["logits"], ref_logits, atol=5e-2)
    assert jnp.allclose(value2, ref_value, atol=5e-2)

    print("KERNEL_OK")
</pallas_src>

<mosaic_0001>
module attributes {stable_mosaic.version = 11 : i64} {
  func.func @_policy_kernel(%arg0: i32, %arg1: memref<8x16xf32, #tpu.memory_space<vmem>>, %arg2: memref<1x128xf32, #tpu.memory_space<vmem>>, %arg3: memref<16x128xbf16, #tpu.memory_space<vmem>>, %arg4: memref<1x128xf32, #tpu.memory_space<vmem>>, %arg5: memref<128x128xbf16, #tpu.memory_space<vmem>>, %arg6: memref<1x128xf32, #tpu.memory_space<vmem>>, %arg7: memref<128x128xf32, #tpu.memory_space<vmem>>, %arg8: memref<1x128xf32, #tpu.memory_space<vmem>>, %arg9: memref<8x128xf32, #tpu.memory_space<vmem>>) attributes {dimension_semantics = [#tpu.dimension_semantics<parallel>], iteration_bounds = array<i64: 1>, scalar_prefetch = 0 : i64, scratch_operands = 0 : i64, tpu.core_type = #tpu.core_type<tc>, window_params = [{transform_indices = @transform_0, window_bounds = array<i64: 8, 16>}, {pipeline_mode = #tpu.pipeline_mode<synchronous>, transform_indices = @transform_1, window_bounds = array<i64: 1, 128>}, {pipeline_mode = #tpu.pipeline_mode<synchronous>, transform_indices = @transform_2, window_bounds = array<i64: 16, 128>}, {pipeline_mode = #tpu.pipeline_mode<synchronous>, transform_indices = @transform_3, window_bounds = array<i64: 1, 128>}, {pipeline_mode = #tpu.pipeline_mode<synchronous>, transform_indices = @transform_4, window_bounds = array<i64: 128, 128>}, {pipeline_mode = #tpu.pipeline_mode<synchronous>, transform_indices = @transform_5, window_bounds = array<i64: 1, 128>}, {pipeline_mode = #tpu.pipeline_mode<synchronous>, transform_indices = @transform_6, window_bounds = array<i64: 128, 128>}, {pipeline_mode = #tpu.pipeline_mode<synchronous>, transform_indices = @transform_7, window_bounds = array<i64: 1, 128>}, {transform_indices = @transform_8, window_bounds = array<i64: 8, 128>}]} {
    %c0 = arith.constant 0 : index
    %c0_0 = arith.constant 0 : index
    %0 = vector.load %arg1[%c0, %c0_0] : memref<8x16xf32, #tpu.memory_space<vmem>>, vector<8x16xf32>
    %1 = arith.truncf %0 : vector<8x16xf32> to vector<8x16xbf16>
    %c0_1 = arith.constant 0 : index
    %c0_2 = arith.constant 0 : index
    %2 = vector.load %arg3[%c0_1, %c0_2] : memref<16x128xbf16, #tpu.memory_space<vmem>>, vector<16x128xbf16>
    %cst = arith.constant dense<0.000000e+00> : vector<8x128xf32>
    %3 = tpu.matmul %1, %2, %cst {dimension_numbers = #tpu.dot_dimension_numbers<[1], [0], [0], [1], [0, 0, 1, 1], [], []>} : vector<8x16xbf16>, vector<16x128xbf16>, vector<8x128xf32> -> vector<8x128xf32>
    %c0_3 = arith.constant 0 : index
    %c0_4 = arith.constant 0 : index
    %4 = vector.load %arg4[%c0_3, %c0_4] : memref<1x128xf32, #tpu.memory_space<vmem>>, vector<1x128xf32>
    %5 = vector.broadcast %4 : vector<1x128xf32> to vector<8x128xf32>
    %6 = arith.addf %3, %5 : vector<8x128xf32>
    %cst_5 = arith.constant 0.000000e+00 : f32
    %7 = vector.broadcast %cst_5 : f32 to vector<8x128xf32>
    %8 = arith.maximumf %6, %7 : vector<8x128xf32>
    %9 = arith.truncf %8 : vector<8x128xf32> to vector<8x128xbf16>
    %c0_6 = arith.constant 0 : index
    %c0_7 = arith.constant 0 : index
    %10 = vector.load %arg5[%c0_6, %c0_7] : memref<128x128xbf16, #tpu.memory_space<vmem>>, vector<128x128xbf16>
    %cst_8 = arith.constant dense<0.000000e+00> : vector<8x128xf32>
    %11 = tpu.matmul %9, %10, %cst_8 {dimension_numbers = #tpu.dot_dimension_numbers<[1], [0], [0], [1], [0, 0, 1, 1], [], []>} : vector<8x128xbf16>, vector<128x128xbf16>, vector<8x128xf32> -> vector<8x128xf32>
    %c0_9 = arith.constant 0 : index
    %c0_10 = arith.constant 0 : index
    %12 = vector.load %arg6[%c0_9, %c0_10] : memref<1x128xf32, #tpu.memory_space<vmem>>, vector<1x128xf32>
    %13 = vector.broadcast %12 : vector<1x128xf32> to vector<8x128xf32>
    %14 = arith.addf %11, %13 : vector<8x128xf32>
    %cst_11 = arith.constant 0.000000e+00 : f32
    %15 = vector.broadcast %cst_11 : f32 to vector<8x128xf32>
    %16 = arith.maximumf %14, %15 : vector<8x128xf32>
    %c0_12 = arith.constant 0 : index
    %c0_13 = arith.constant 0 : index
    %17 = vector.load %arg7[%c0_12, %c0_13] : memref<128x128xf32, #tpu.memory_space<vmem>>, vector<128x128xf32>
    %cst_14 = arith.constant dense<0.000000e+00> : vector<8x128xf32>
    %18 = tpu.matmul %16, %17, %cst_14 {dimension_numbers = #tpu.dot_dimension_numbers<[1], [0], [0], [1], [0, 0, 1, 1], [], []>} : vector<8x128xf32>, vector<128x128xf32>, vector<8x128xf32> -> vector<8x128xf32>
    %c0_15 = arith.constant 0 : index
    %c0_16 = arith.constant 0 : index
    %19 = vector.load %arg8[%c0_15, %c0_16] : memref<1x128xf32, #tpu.memory_space<vmem>>, vector<1x128xf32>
    %20 = vector.broadcast %19 : vector<1x128xf32> to vector<8x128xf32>
    %21 = arith.addf %18, %20 : vector<8x128xf32>
    %c0_17 = arith.constant 0 : index
    %c0_18 = arith.constant 0 : index
    %22 = vector.load %arg2[%c0_17, %c0_18] : memref<1x128xf32, #tpu.memory_space<vmem>>, vector<1x128xf32>
    %23 = vector.broadcast %22 : vector<1x128xf32> to vector<8x128xf32>
    %24 = arith.addf %21, %23 : vector<8x128xf32>
    %cst_19 = arith.constant dense<0xFF800000> : vector<8xf32>
    %25 = vector.multi_reduction <maximumf>, %24, %cst_19 [1] : vector<8x128xf32> to vector<8xf32>
    %26 = vector.shape_cast %25 : vector<8xf32> to vector<8x1xf32>
    %27 = vector.broadcast %26 : vector<8x1xf32> to vector<8x128xf32>
    %28 = arith.subf %24, %27 : vector<8x128xf32>
    %29 = math.exp %28 : vector<8x128xf32>
    %cst_20 = arith.constant dense<0.000000e+00> : vector<8xf32>
    %30 = vector.multi_reduction <add>, %29, %cst_20 [1] : vector<8x128xf32> to vector<8xf32>
    %31 = vector.shape_cast %30 : vector<8xf32> to vector<8x1xf32>
    %32 = math.log %31 : vector<8x1xf32>
    %33 = arith.addf %26, %32 : vector<8x1xf32>
    %34 = vector.broadcast %33 : vector<8x1xf32> to vector<8x128xf32>
    %35 = arith.subf %21, %34 : vector<8x128xf32>
    %cst_21 = arith.constant 0.000000e+00 : f32
    %36 = vector.broadcast %cst_21 : f32 to vector<8x128xf32>
    %c0_22 = arith.constant 0 : index
    %c0_23 = arith.constant 0 : index
    %37 = vector.load %arg9[%c0_22, %c0_23] : memref<8x128xf32, #tpu.memory_space<vmem>>, vector<8x128xf32>
    tpu.vector_store %arg9[%c0_22, %c0_23], %36 {strides = array<i32>} : memref<8x128xf32, #tpu.memory_space<vmem>>, vector<8x128xf32>,
    %38 = vector.extract_strided_slice %21 {offsets = [0, 0], sizes = [8, 4], strides = [1, 1]} : vector<8x128xf32> to vector<8x4xf32>
    %c0_24 = arith.constant 0 : index
    %c0_25 = arith.constant 0 : index
    %39 = vector.load %arg9[%c0_24, %c0_25] : memref<8x128xf32, #tpu.memory_space<vmem>>, vector<8x4xf32>
    tpu.vector_store %arg9[%c0_24, %c0_25], %38 {strides = array<i32>} : memref<8x128xf32, #tpu.memory_space<vmem>>, vector<8x4xf32>,
    %40 = vector.extract_strided_slice %35 {offsets = [0, 0], sizes = [8, 4], strides = [1, 1]} : vector<8x128xf32> to vector<8x4xf32>
    %c0_26 = arith.constant 0 : index
    %c4 = arith.constant 4 : index
    %41 = vector.load %arg9[%c0_26, %c4] : memref<8x128xf32, #tpu.memory_space<vmem>>, vector<8x4xf32>
    tpu.vector_store %arg9[%c0_26, %c4], %40 {strides = array<i32>} : memref<8x128xf32, #tpu.memory_space<vmem>>, vector<8x4xf32>,
    %42 = vector.extract_strided_slice %21 {offsets = [0, 4], sizes = [8, 1], strides = [1, 1]} : vector<8x128xf32> to vector<8x1xf32>
    %c0_27 = arith.constant 0 : index
    %c8 = arith.constant 8 : index
    %43 = vector.load %arg9[%c0_27, %c8] : memref<8x128xf32, #tpu.memory_space<vmem>>, vector<8x1xf32>
    tpu.vector_store %arg9[%c0_27, %c8], %42 {strides = array<i32>} : memref<8x128xf32, #tpu.memory_space<vmem>>, vector<8x1xf32>,
    %44 = vector.extract_strided_slice %8 {offsets = [0, 0], sizes = [8, 32], strides = [1, 1]} : vector<8x128xf32> to vector<8x32xf32>
    %c0_28 = arith.constant 0 : index
    %c9 = arith.constant 9 : index
    %45 = vector.load %arg9[%c0_28, %c9] : memref<8x128xf32, #tpu.memory_space<vmem>>, vector<8x32xf32>
    tpu.vector_store %arg9[%c0_28, %c9], %44 {strides = array<i32>} : memref<8x128xf32, #tpu.memory_space<vmem>>, vector<8x32xf32>,
    return
  }
  func.func @transform_0(%arg0: i32) -> (i32, i32) {
    %c0_i32 = arith.constant 0 : i32
    %c0_i32_0 = arith.constant 0 : i32
    return %arg0, %c0_i32 : i32, i32
  }
  func.func @transform_1(%arg0: i32) -> (i32, i32) {
    %c0_i32 = arith.constant 0 : i32
    %c0_i32_0 = arith.constant 0 : i32
    %c0_i32_1 = arith.constant 0 : i32
    return %c0_i32, %c0_i32_0 : i32, i32
  }
  func.func @transform_2(%arg0: i32) -> (i32, i32) {
    %c0_i32 = arith.constant 0 : i32
    %c0_i32_0 = arith.constant 0 : i32
    %c0_i32_1 = arith.constant 0 : i32
    return %c0_i32, %c0_i32_0 : i32, i32
  }
  func.func @transform_3(%arg0: i32) -> (i32, i32) {
    %c0_i32 = arith.constant 0 : i32
    %c0_i32_0 = arith.constant 0 : i32
    %c0_i32_1 = arith.constant 0 : i32
    return %c0_i32, %c0_i32_0 : i32, i32
  }
  func.func @transform_4(%arg0: i32) -> (i32, i32) {
    %c0_i32 = arith.constant 0 : i32
    %c0_i32_0 = arith.constant 0 : i32
    %c0_i32_1 = arith.constant 0 : i32
    return %c0_i32, %c0_i32_0 : i32, i32
  }
  func.func @transform_5(%arg0: i32) -> (i32, i32) {
    %c0_i32 = arith.constant 0 : i32
    %c0_i32_0 = arith.constant 0 : i32
    %c0_i32_1 = arith.constant 0 : i32
    return %c0_i32, %c0_i32_0 : i32, i32
  }
  func.func @transform_6(%arg0: i32) -> (i32, i32) {
    %c0_i32 = arith.constant 0 : i32
    %c0_i32_0 = arith.constant 0 : i32
    %c0_i32_1 = arith.constant 0 : i32
    return %c0_i32, %c0_i32_0 : i32, i32
  }
  func.func @transform_7(%arg0: i32) -> (i32, i32) {
    %c0_i32 = arith.constant 0 : i32
    %c0_i32_0 = arith.constant 0 : i32
    %c0_i32_1 = arith.constant 0 : i32
    return %c0_i32, %c0_i32_0 : i32, i32
  }
  func.func @transform_8(%arg0: i32) -> (i32, i32) {
    %c0_i32 = arith.constant 0 : i32
    %c0_i32_0 = arith.constant 0 : i32
    return %arg0, %c0_i32 : i32, i32
  }
}

</mosaic_0001>

<llo_original>
// kernel: tpu_custom_call.1
$region0: #{tpu_custom_call.1}
  #allocation0 [shape = 'u32[]', space=smem, size = 0x4, offset = 0x4, fixed_abs, tag = 'smem constant byte address 0x4 - core index']
  #allocation1 [shape = 'u32[144,128]{1,0:T(1,128)}', space=vmem, size = 0x12000, scoped, tag = 'internal scratch']
  %s0 = inlined_call_operand.hbm [shape: f32[8,16], index: 0, kind: input, shape index: {}]
  %s1 = inlined_call_operand.vmem [shape: f32[1,128], index: 1, kind: input, shape index: {}]
  %s2 = inlined_call_operand.hbm [shape: bf16[16,128], index: 2, kind: input, shape index: {}]
  %s3 = inlined_call_operand.vmem [shape: f32[1,128], index: 3, kind: input, shape index: {}]
  %s4 = inlined_call_operand.hbm [shape: bf16[128,128], index: 4, kind: input, shape index: {}]
  %s5 = inlined_call_operand.vmem [shape: f32[1,128], index: 5, kind: input, shape index: {}]
  %s6 = inlined_call_operand.hbm [shape: f32[128,128], index: 6, kind: input, shape index: {}]
  %s7 = inlined_call_operand.vmem [shape: f32[1,128], index: 7, kind: input, shape index: {}]
  %s8 = inlined_call_operand.hbm [shape: f32[8,128], index: 8, kind: output, shape index: {}]
  %s9 = sld [smem:[#allocation0]]
  $region58: #{tpu_custom_call.1} parent=0
    _
  %s11 = ssub.s32 1, %s9
  %s12 = scalar_select 0, %s11, %s9
  $region1: #{tpu_custom_call.1} parent=0
    #allocation2 [shape = 'u8[4096]{0}', space=vmem, size = 0x1000, scoped, tag = 'input window, operand 0, single buffered']
    #allocation3 [shape = 's32[1]{0}', space=sflag, size = 0x4, scoped, tag = 'scoped memory for tpu_custom_call.1']
    #allocation4 [shape = 's32[1]{0}', space=sflag, size = 0x4, scoped, tag = 'scoped memory for tpu_custom_call.1']
    #allocation5 [shape = 'u8[4096]{0}', space=vmem, size = 0x1000, scoped, tag = 'input window, operand 2, single buffered']
    #allocation6 [shape = 's32[1]{0}', space=sflag, size = 0x4, scoped, tag = 'scoped memory for tpu_custom_call.1']
    #allocation7 [shape = 'u8[32768]{0}', space=vmem, size = 0x8000, scoped, tag = 'input window, operand 4, single buffered']
    #allocation8 [shape = 'u8[65536]{0}', space=vmem, size = 0x10000, scoped, tag = 'input window, operand 6, single buffered']
    #allocation9 [shape = 's32[1]{0}', space=sflag, size = 0x4, scoped, tag = 'scoped memory for tpu_custom_call.1']
    #allocation10 [shape = 'u8[4096]{0}', space=vmem, size = 0x1000, scoped, tag = 'output window, operand 0, single buffered']
    %13 = vsyncpa [#allocation3], 0
    %14 = vsyncpa [#allocation6], 0
    %15 = vsyncpa [#allocation9], 0
    %16 = vsyncpa [#allocation4], 0
    // Predicated region
    $region2: #{tpu_custom_call.1} parent=1 // pred_check
      _
    $region3: #{tpu_custom_call.1} parent=1 // pred_check_branch
      %18 = sbr.rel (0) target = $region5
    $region4: #{tpu_custom_call.1} parent=1 // pred_region
      %s20 = ssub.s32 128, 128
      %21 = vsyncadd [#allocation3], %s20
      %s23 = sshll.u32 [#allocation2], 4
      %s24 = int_to_ptr.vmem [resolvable:$true] %s23
      %26 = dma.hbm_to_vmem [thread:$0]  %s0, 128, %s24, [#allocation3]
    $region5: #{tpu_custom_call.1} parent=1 // pred_fallthru
      _
    // Predicated region
    $region6: #{tpu_custom_call.1} parent=1 // pred_check
      _
    $region7: #{tpu_custom_call.1} parent=1 // pred_check_branch
      %28 = sbr.rel (0) target = $region9
    $region8: #{tpu_custom_call.1} parent=1 // pred_region
      _
    $region9: #{tpu_custom_call.1} parent=1 // pred_fallthru
      _
    // Predicated region
    $region10: #{tpu_custom_call.1} parent=1 // pred_check
      _
    $region11: #{tpu_custom_call.1} parent=1 // pred_check_branch
      %30 = sbr.rel (0) target = $region13
    $region12: #{tpu_custom_call.1} parent=1 // pred_region
      %s32 = ssub.s32 128, 128
      %33 = vsyncadd [#allocation6], %s32
      %s34 = sshll.u32 [#allocation5], 4
      %s35 = int_to_ptr.vmem [resolvable:$true] %s34
      %40 = dma.hbm_to_vmem [thread:$0]  %s2, 128, %s35, [#allocation6], 64, 64, 4
    $region13: #{tpu_custom_call.1} parent=1 // pred_fallthru
      _
    // Predicated region
    $region14: #{tpu_custom_call.1} parent=1 // pred_check
      _
    $region15: #{tpu_custom_call.1} parent=1 // pred_check_branch
      %42 = sbr.rel (0) target = $region17
    $region16: #{tpu_custom_call.1} parent=1 // pred_region
      _
    $region17: #{tpu_custom_call.1} parent=1 // pred_fallthru
      _
    // Predicated region
    $region18: #{tpu_custom_call.1} parent=1 // pred_check
      _
    $region19: #{tpu_custom_call.1} parent=1 // pred_check_branch
      %44 = sbr.rel (0) target = $region21
    $region20: #{tpu_custom_call.1} parent=1 // pred_region
      %s46 = ssub.s32 1024, 1024
      %47 = vsyncadd [#allocation6], %s46
      %s48 = sshll.u32 [#allocation7], 4
      %s49 = int_to_ptr.vmem [resolvable:$true] %s48
      %54 = dma.hbm_to_vmem [thread:$0]  %s4, 1024, %s49, [#allocation6], 64, 64, 4
    $region21: #{tpu_custom_call.1} parent=1 // pred_fallthru
      _
    // Predicated region
    $region22: #{tpu_custom_call.1} parent=1 // pred_check
      _
    $region23: #{tpu_custom_call.1} parent=1 // pred_check_branch
      %56 = sbr.rel (0) target = $region25
    $region24: #{tpu_custom_call.1} parent=1 // pred_region
      _
    $region25: #{tpu_custom_call.1} parent=1 // pred_fallthru
      _
    // Predicated region
    $region26: #{tpu_custom_call.1} parent=1 // pred_check
      _
    $region27: #{tpu_custom_call.1} parent=1 // pred_check_branch
      %58 = sbr.rel (0) target = $region29
    $region28: #{tpu_custom_call.1} parent=1 // pred_region
      %s60 = ssub.s32 2048, 2048
      %61 = vsyncadd [#allocation9], %s60
      %s62 = sshll.u32 [#allocation8], 4
      %s63 = int_to_ptr.vmem [resolvable:$true] %s62
      %68 = dma.hbm_to_vmem [thread:$0]  %s6, 2048, %s63, [#allocation9], 128, 128, 8
    $region29: #{tpu_custom_call.1} parent=1 // pred_fallthru
      _
    // Predicated region
    $region30: #{tpu_custom_call.1} parent=1 // pred_check
      _
    $region31: #{tpu_custom_call.1} parent=1 // pred_check_branch
      %70 = sbr.rel (0) target = $region33
    $region32: #{tpu_custom_call.1} parent=1 // pred_region
      _
    $region33: #{tpu_custom_call.1} parent=1 // pred_fallthru
      _
    // Predicated region
    $region34: #{tpu_custom_call.1} parent=1 // pred_check
      _
    $region35: #{tpu_custom_call.1} parent=1 // pred_check_branch
      %72 = sbr.rel (0) target = $region37
    $region36: #{tpu_custom_call.1} parent=1 // pred_region
      %73 = dma.done [#allocation3], 128
    $region37: #{tpu_custom_call.1} parent=1 // pred_fallthru
      _
    // Predicated region
    $region38: #{tpu_custom_call.1} parent=1 // pred_check
      _
    $region39: #{tpu_custom_call.1} parent=1 // pred_check_branch
      %75 = sbr.rel (0) target = $region41
    $region40: #{tpu_custom_call.1} parent=1 // pred_region
      %76 = dma.done [#allocation6], 128
    $region41: #{tpu_custom_call.1} parent=1 // pred_fallthru
      _
    // Predicated region
    $region42: #{tpu_custom_call.1} parent=1 // pred_check
      _
    $region43: #{tpu_custom_call.1} parent=1 // pred_check_branch
      %78 = sbr.rel (0) target = $region45
    $region44: #{tpu_custom_call.1} parent=1 // pred_region
      %79 = dma.done [#allocation6], 1024
    $region45: #{tpu_custom_call.1} parent=1 // pred_fallthru
      _
    // Predicated region
    $region46: #{tpu_custom_call.1} parent=1 // pred_check
      _
    $region47: #{tpu_custom_call.1} parent=1 // pred_check_branch
      %81 = sbr.rel (0) target = $region49
    $region48: #{tpu_custom_call.1} parent=1 // pred_region
      %82 = dma.done [#allocation9], 2048
    $region49: #{tpu_custom_call.1} parent=1 // pred_fallthru
      _
    %v84 = vld [vmem:[#allocation2] sm:$0xff]
    %v85 = vpack.c.bf16 %v84, %v84
    %v86 = vld [vmem:[#allocation5] sm:$0xf]
    %v87 = vld [vmem:[#allocation5 + $0x4] sm:$0xf]
    %v88 = vld [vmem:[%s3] sm:$0x1]
    %v90 = vlaneseq
    %v91 = vshrl.u32 %v90, 7
    %v92 = vsub.s32 0, %v91
    %v93 = vrot.slane %v88, %v92
    %v97 = vunpack.c.l.b16 %v86
    %v98 = vunpack.c.l.b16 %v87
    %v99 = vpack.c.b16 %v98, %v97
    %vm101 = vcmask 130048
    %v103 = vsel %vm101, %v85, 0
    %105 = vmatprep.subr.bf16.mxu0 0
    %106 = vmatpush1.bf16.msra.mxu0 %v99
    %107 = vmatprep.subr.bf16.mxu0 0
    %108 = vmatpush1.bf16.msra.mxu0 0
    %109 = vmatprep.subr.bf16.mxu0 0
    %110 = vmatpush1.bf16.msra.mxu0 0
    %111 = vmatprep.subr.bf16.mxu0 0
    %112 = vmatpush1.bf16.msra.mxu0 0
    %113 = vmatprep.subr.bf16.mxu0 0
    %114 = vmatpush1.bf16.msra.mxu0 0
    %115 = vmatprep.subr.bf16.mxu0 0
    %116 = vmatpush1.bf16.msra.mxu0 0
    %117 = vmatprep.subr.bf16.mxu0 0
    %118 = vmatpush1.bf16.msra.mxu0 0
    %119 = vmatprep.subr.bf16.mxu0 0
    %120 = vmatpush1.bf16.msra.mxu0 0
    %121 = vmatprep.subr.bf16.mxu0 0
    %122 = vmatpush1.bf16.msra.mxu0 0
    %123 = vmatprep.subr.bf16.mxu0 0
    %124 = vmatpush1.bf16.msra.mxu0 0
    %125 = vmatprep.subr.bf16.mxu0 0
    %126 = vmatpush1.bf16.msra.mxu0 0
    %127 = vmatprep.subr.bf16.mxu0 0
    %128 = vmatpush1.bf16.msra.mxu0 0
    %129 = vmatprep.subr.bf16.mxu0 0
    %130 = vmatpush1.bf16.msra.mxu0 0
    %131 = vmatprep.subr.bf16.mxu0 0
    %132 = vmatpush1.bf16.msra.mxu0 0
    %133 = vmatprep.subr.bf16.mxu0 0
    %134 = vmatpush1.bf16.msra.mxu0 0
    %135 = vmatprep.subr.bf16.mxu0 0
    %136 = vmatpush1.bf16.msra.mxu0 0
    %137 = vmatprep.mubr.bf16.mxu0 0
    %138 = vmatmul.mubr.bf16.gmra.mrb[0].mxu0 %v103
    %v139 = vpop.f32.mrb[0].mxu0
    %v140 = vadd.f32 %v93, %v139
    %v141 = vpop.f32.mrb[0].mxu0
    %v142 = vpop.f32.mrb[0].mxu0
    %v143 = vpop.f32.mrb[0].mxu0
    %144 = vdwg.mxu0
    %v145 = vmax.f32 %v140, 0.0
    %v146 = vpack.c.bf16 %v145, %v145
    %v147 = vld [vmem:[#allocation7] sm:$0xf]
    %v148 = vld [vmem:[#allocation7 + $0x4] sm:$0xf]
    %v149 = vld [vmem:[#allocation7 + $0x8] sm:$0xf]
    %v150 = vld [vmem:[#allocation7 + $0xc] sm:$0xf]
    %v151 = vld [vmem:[#allocation7 + $0x10] sm:$0xf]
    %v152 = vld [vmem:[#allocation7 + $0x14] sm:$0xf]
    %v153 = vld [vmem:[#allocation7 + $0x18] sm:$0xf]
    %v154 = vld [vmem:[#allocation7 + $0x1c] sm:$0xf]
    %v155 = vld [vmem:[#allocation7 + $0x20] sm:$0xf]
    %v156 = vld [vmem:[#allocation7 + $0x24] sm:$0xf]
    %v157 = vld [vmem:[#allocation7 + $0x28] sm:$0xf]
    %v158 = vld [vmem:[#allocation7 + $0x2c] sm:$0xf]
    %v159 = vld [vmem:[#allocation7 + $0x30] sm:$0xf]
    %v160 = vld [vmem:[#allocation7 + $0x34] sm:$0xf]
    %v161 = vld [vmem:[#allocation7 + $0x38] sm:$0xf]
    %v162 = vld [vmem:[#allocation7 + $0x3c] sm:$0xf]
    %v163 = vld [vmem:[%s5] sm:$0x1]
    %v165 = vlaneseq
    %v166 = vshrl.u32 %v165, 7
    %v167 = vsub.s32 0, %v166
    %v168 = vrot.slane %v163, %v167
    %v186 = vunpack.c.l.b16 %v147
    %v187 = vunpack.c.l.b16 %v148
    %v188 = vunpack.c.l.b16 %v149
    %v189 = vunpack.c.l.b16 %v150
    %v190 = vunpack.c.l.b16 %v151
    %v191 = vunpack.c.l.b16 %v152
    %v192 = vunpack.c.l.b16 %v153
    %v193 = vunpack.c.l.b16 %v154
    %v194 = vunpack.c.l.b16 %v155
    %v195 = vunpack.c.l.b16 %v156
    %v196 = vunpack.c.l.b16 %v157
    %v197 = vunpack.c.l.b16 %v158
    %v198 = vunpack.c.l.b16 %v159
    %v199 = vunpack.c.l.b16 %v160
    %v200 = vunpack.c.l.b16 %v161
    %v201 = vunpack.c.l.b16 %v162
    %v202 = vpack.c.b16 %v187, %v186
    %v203 = vpack.c.b16 %v189, %v188
    %v204 = vpack.c.b16 %v191, %v190
    %v205 = vpack.c.b16 %v193, %v192
    %v206 = vpack.c.b16 %v195, %v194
    %v207 = vpack.c.b16 %v197, %v196
    %v208 = vpack.c.b16 %v199, %v198
    %v209 = vpack.c.b16 %v201, %v200
    %218 = vmatprep.subr.bf16.mxu0 0
    %219 = vmatpush1.bf16.msra.mxu0 %v202
    %220 = vmatprep.subr.bf16.mxu0 0
    %221 = vmatpush1.bf16.msra.mxu0 %v203
    %222 = vmatprep.subr.bf16.mxu0 0
    %223 = vmatpush1.bf16.msra.mxu0 %v204
    %224 = vmatprep.subr.bf16.mxu0 0
    %225 = vmatpush1.bf16.msra.mxu0 %v205
    %226 = vmatprep.subr.bf16.mxu0 0
    %227 = vmatpush1.bf16.msra.mxu0 %v206
    %228 = vmatprep.subr.bf16.mxu0 0
    %229 = vmatpush1.bf16.msra.mxu0 %v207
    %230 = vmatprep.subr.bf16.mxu0 0
    %231 = vmatpush1.bf16.msra.mxu0 %v208
    %232 = vmatprep.subr.bf16.mxu0 0
    %233 = vmatpush1.bf16.msra.mxu0 %v209
    %234 = vmatprep.subr.bf16.mxu0 0
    %235 = vmatpush1.bf16.msra.mxu0 0
    %236 = vmatprep.subr.bf16.mxu0 0
    %237 = vmatpush1.bf16.msra.mxu0 0
    %238 = vmatprep.subr.bf16.mxu0 0
    %239 = vmatpush1.bf16.msra.mxu0 0
    %240 = vmatprep.subr.bf16.mxu0 0
    %241 = vmatpush1.bf16.msra.mxu0 0
    %242 = vmatprep.subr.bf16.mxu0 0
    %243 = vmatpush1.bf16.msra.mxu0 0
    %244 = vmatprep.subr.bf16.mxu0 0
    %245 = vmatpush1.bf16.msra.mxu0 0
    %246 = vmatprep.subr.bf16.mxu0 0
    %247 = vmatpush1.bf16.msra.mxu0 0
    %248 = vmatprep.subr.bf16.mxu0 0
    %249 = vmatpush1.bf16.msra.mxu0 0
    %250 = vmatprep.mubr.bf16.mxu0 0
    %251 = vmatmul.mubr.bf16.gmra.mrb[0].mxu0 %v146
    %v252 = vpop.f32.mrb[0].mxu0
    %v253 = vadd.f32 %v168, %v252
    %v254 = vpop.f32.mrb[0].mxu0
    %v255 = vpop.f32.mrb[0].mxu0
    %v256 = vpop.f32.mrb[0].mxu0
    %257 = vdwg.mxu0
    %v258 = vmax.f32 %v253, 0.0
    %v259 = vld [vmem:[#allocation8] sm:$0xff]
    %v260 = vld [vmem:[#allocation8 + $0x8] sm:$0xff]
    %v261 = vld [vmem:[#allocation8 + $0x10] sm:$0xff]
    %v262 = vld [vmem:[#allocation8 + $0x18] sm:$0xff]
    %v263 = vld [vmem:[#allocation8 + $0x20] sm:$0xff]
    %v264 = vld [vmem:[#allocation8 + $0x28] sm:$0xff]
    %v265 = vld [vmem:[#allocation8 + $0x30] sm:$0xff]
    %v266 = vld [vmem:[#allocation8 + $0x38] sm:$0xff]
    %v267 = vld [vmem:[#allocation8 + $0x40] sm:$0xff]
    %v268 = vld [vmem:[#allocation8 + $0x48] sm:$0xff]
    %v269 = vld [vmem:[#allocation8 + $0x50] sm:$0xff]
    %v270 = vld [vmem:[#allocation8 + $0x58] sm:$0xff]
    %v271 = vld [vmem:[#allocation8 + $0x60] sm:$0xff]
    %v272 = vld [vmem:[#allocation8 + $0x68] sm:$0xff]
    %v273 = vld [vmem:[#allocation8 + $0x70] sm:$0xff]
    %v274 = vld [vmem:[#allocation8 + $0x78] sm:$0xff]
    %v275 = vld [vmem:[%s7] sm:$0x1]
    %v277 = vlaneseq
    %v278 = vshrl.u32 %v277, 7
    %v279 = vsub.s32 0, %v278
    %v280 = vrot.slane %v275, %v279
    %282 = vmatprep.subr.mxu0 0.0
    %283 = vmatpush1.msra.mxu0 %v259
    %284 = vmatprep.subr.mxu0 0.0
    %285 = vmatpush1.msra.mxu0 %v260
    %286 = vmatprep.subr.mxu0 0.0
    %287 = vmatpush1.msra.mxu0 %v261
    %288 = vmatprep.subr.mxu0 0.0
    %289 = vmatpush1.msra.mxu0 %v262
    %290 = vmatprep.subr.mxu0 0.0
    %291 = vmatpush1.msra.mxu0 %v263
    %292 = vmatprep.subr.mxu0 0.0
    %293 = vmatpush1.msra.mxu0 %v264
    %294 = vmatprep.subr.mxu0 0.0
    %295 = vmatpush1.msra.mxu0 %v265
    %296 = vmatprep.subr.mxu0 0.0
    %297 = vmatpush1.msra.mxu0 %v266
    %298 = vmatprep.subr.mxu0 0.0
    %299 = vmatpush1.msra.mxu0 %v267
    %300 = vmatprep.subr.mxu0 0.0
    %301 = vmatpush1.msra.mxu0 %v268
    %302 = vmatprep.subr.mxu0 0.0
    %303 = vmatpush1.msra.mxu0 %v269
    %304 = vmatprep.subr.mxu0 0.0
    %305 = vmatpush1.msra.mxu0 %v270
    %306 = vmatprep.subr.mxu0 0.0
    %307 = vmatpush1.msra.mxu0 %v271
    %308 = vmatprep.subr.mxu0 0.0
    %309 = vmatpush1.msra.mxu0 %v272
    %310 = vmatprep.subr.mxu0 0.0
    %311 = vmatpush1.msra.mxu0 %v273
    %312 = vmatprep.subr.mxu0 0.0
    %313 = vmatpush1.msra.mxu0 %v274
    %314 = vmatprep.subr.mxu0 0.0
    %315 = vmatpush1.msra.mxu0 0.0
    %316 = vmatprep.subr.mxu0 0.0
    %317 = vmatpush1.msra.mxu0 0.0
    %318 = vmatprep.subr.mxu0 0.0
    %319 = vmatpush1.msra.mxu0 0.0
    %320 = vmatprep.subr.mxu0 0.0
    %321 = vmatpush1.msra.mxu0 0.0
    %322 = vmatprep.subr.mxu0 0.0
    %323 = vmatpush1.msra.mxu0 0.0
    %324 = vmatprep.subr.mxu0 0.0
    %325 = vmatpush1.msra.mxu0 0.0
    %326 = vmatprep.subr.mxu0 0.0
    %327 = vmatpush1.msra.mxu0 0.0
    %328 = vmatprep.subr.mxu0 0.0
    %329 = vmatpush1.msra.mxu0 0.0
    %330 = vmatprep.subr.mxu0 0.0
    %331 = vmatpush1.msra.mxu0 0.0
    %332 = vmatprep.subr.mxu0 0.0
    %333 = vmatpush1.msra.mxu0 0.0
    %334 = vmatprep.subr.mxu0 0.0
    %335 = vmatpush1.msra.mxu0 0.0
    %336 = vmatprep.subr.mxu0 0.0
    %337 = vmatpush1.msra.mxu0 0.0
    %338 = vmatprep.subr.mxu0 0.0
    %339 = vmatpush1.msra.mxu0 0.0
    %340 = vmatprep.subr.mxu0 0.0
    %341 = vmatpush1.msra.mxu0 0.0
    %342 = vmatprep.subr.mxu0 0.0
    %343 = vmatpush1.msra.mxu0 0.0
    %344 = vmatprep.subr.mxu0 0.0
    %345 = vmatpush1.msra.mxu0 0.0
    %346 = vmatprep.mubr.f32.mxu0 0.0
    %347 = vmatmul.mubr.f32.gmra.mrb[0].mxu0 %v258
    %v348 = vpop.f32.mrb[0].mxu0
    %v349 = vadd.f32 %v280, %v348
    %v350 = vpop.f32.mrb[0].mxu0
    %351 = vdwg.mxu0
    %v352 = vld [vmem:[%s1] sm:$0x1]
    %v354 = vlaneseq
    %v355 = vshrl.u32 %v354, 7
    %v356 = vsub.s32 0, %v355
    %v357 = vrot.slane %v352, %v356
    %v359 = vadd.f32 %v349, %v357
    %360 = vmax.xlane.f32.xlu0 %v359
    %v361 = vpop.xlane.xlu0 %360
    %v362 = vsub.f32 %v359, %v361
    %v363 = vmul.f32 %v362, 1.442695
    %v364 = vpow.pop %v363
    %365 = vadd.xlane.f32.xlu0 %v364
    %v366 = vpop.xlane.xlu0 %365
    %v367 = vlog2.pop %v366
    %v368 = vmul.f32 %v367, 0.6931472
    %v369 = vadd.f32 %v361, %v368
    %v370 = vsub.f32 %v349, %v369
    %371 = vst [vmem:[#allocation10] sm:$0xff] 0.0
    %vm372 = vcmask 31744
    %373 = vst.msk [vmem:[#allocation10] sm:$0xff] %vm372, %v349
    %375 = vrot.lane.b32.xlu0 %v370, 4
    %v376 = vpop.permute.xlu0 %375
    %vm378 = vcmask 64544
    %379 = vst.msk [vmem:[#allocation10] sm:$0xff] %vm378, %v376
    %381 = vrot.lane.b32.xlu0 %v349, 4
    %v382 = vpop.permute.xlu0 %381
    %vm384 = vcmask 72768
    %385 = vst.msk [vmem:[#allocation10] sm:$0xff] %vm384, %v382
    %387 = vrot.lane.b32.xlu0 %v145, 9
    %v388 = vpop.permute.xlu0 %387
    %vm390 = vcmask 334920
    %391 = vst.msk [vmem:[#allocation10] sm:$0xff] %vm390, %v388
    // Predicated region
    $region50: #{tpu_custom_call.1} parent=1 // pred_check
      _
    $region51: #{tpu_custom_call.1} parent=1 // pred_check_branch
      %393 = sbr.rel (0) target = $region53
    $region52: #{tpu_custom_call.1} parent=1 // pred_region
      %s395 = ssub.s32 128, 128
      %396 = vsyncadd [#allocation4], %s395
      %s398 = sshll.u32 [#allocation10], 4
      %s399 = int_to_ptr.vmem [resolvable:$true] %s398
      %401 = dma.vmem_to_hbm [thread:$0]  %s399, 128, %s8, [#allocation4]
    $region53: #{tpu_custom_call.1} parent=1 // pred_fallthru
      _
    // Predicated region
    $region54: #{tpu_custom_call.1} parent=1 // pred_check
      _
    $region55: #{tpu_custom_call.1} parent=1 // pred_check_branch
      %403 = sbr.rel (0) target = $region57
    $region56: #{tpu_custom_call.1} parent=1 // pred_region
      %404 = dma.done [#allocation4], 128
    $region57: #{tpu_custom_call.1} parent=1 // pred_fallthru
      _
    %405 = vsyncpa [#allocation3], 1
    %406 = vsyncpa [#allocation6], 1
    %407 = vsyncpa [#allocation9], 1
    %408 = vsyncpa [#allocation4], 1

</llo_original>
